<compile_context>
chip_gen: v7x
topology: tpu7x:2x2x1
jax: 0.10.0
libtpu: 0.0.40
codegen_flags: <defaults>
</compile_context>

<pallas_src>
import jax
import jax.numpy as jnp
from jax import lax
from jax.experimental import pallas as pl
from jax.experimental.pallas import tpu as pltpu


def _sigmoid(z):
    # sigmoid(z) == 0.5 * (tanh(z/2) + 1): a single EUP op per element instead
    # of exp + reciprocal, with full f32 accuracy.
    return 0.5 * (jnp.tanh(0.5 * z) + 1.0)


def mlp_kernel(x_ref, w1t_ref, b1_ref, w2t_ref, b2_ref, w3r_ref, b3_ref, o_ref):
    # x_ref: (TB, 29) batch tile.  All activations are computed batch-on-lanes.

    # Layer 1 (MXU, A.B^T contraction -> no explicit transpose of the x tile):
    #   (20, 29) . (TB, 29)^T -> (20, TB)
    z1 = lax.dot_general(
        w1t_ref[...], x_ref[...],
        dimension_numbers=(((1,), (1,)), ((), ())),
        preferred_element_type=jnp.float32,
    ) + b1_ref[...]                     # (20, 1) bias column broadcast over lanes
    h1 = _sigmoid(z1)                   # (20, TB), lane-dense EUP work

    # Layer 2 (MXU): (11, 20) @ (20, TB) -> (11, TB)
    z2 = jnp.dot(w2t_ref[...], h1, preferred_element_type=jnp.float32) + b2_ref[...]
    h2 = _sigmoid(z2)                   # (11, TB)

    # Layer 3: (1, 11) @ (11, TB) -> (1, TB); batch on lanes -> lane-dense store.
    z3 = jnp.dot(w3r_ref[...], h2, preferred_element_type=jnp.float32) + b3_ref[0]
    o_ref[...] = _sigmoid(z3)


def _round_up(n, m):
    return ((n + m - 1) // m) * m


def _pick_tile(batch, tb):
    """Per-step batch-tile size (sublane axis of the x block, lane axis of out)."""
    tb = max(128, (int(tb) // 128) * 128)          # lane-aligned tile cap
    if batch <= tb:
        # Single tile covering the whole batch; only round to the 8-row sublane
        # granule.  Any partial tail is handled by Pallas boundary masking and
        # dropped in the wrapper (rows are independent).
        return min(_round_up(batch, 8), tb)
    # Multi-tile: cap at `tb`, but keep >= 2 (balanced) tiles so the "parallel"
    # grid axis can be split across both TensorCores on v7x.
    return min(tb, _round_up(pl.cdiv(batch, 2), 128))


def mlp_forward(x, params, *, tb=16384):
    """x: (B, 29) f32.  params: (w1, b1, w2, b2, w3, b3); weights stored (in, out)."""
    w1, b1, w2, b2, w3, b3 = params
    B = x.shape[0]

    TB = _pick_tile(B, tb)
    num_tiles = pl.cdiv(B, TB)
    W = num_tiles * TB                  # padded (lane) width of the output slab

    # Tiny parameter reshapes (negligible): feature-major weights, bias columns.
    w1_t = w1.T                         # (20, 29)
    w2_t = w2.T                         # (11, 20)
    w3_row = w3.T                       # (1, 11)
    b1_col = b1.reshape(20, 1)
    b2_col = b2.reshape(11, 1)
    b3_smem = jnp.reshape(b3, (1,))     # expects b3 of shape (1,) or (1, 1)

    const = lambda i: (0, 0)            # weights/biases: resident, never re-DMA'd

    out_slab = pl.pallas_call(
        mlp_kernel,
        out_shape=jax.ShapeDtypeStruct((1, W), jnp.float32),
        grid_spec=pltpu.PrefetchScalarGridSpec(
            num_scalar_prefetch=0,
            grid=(num_tiles,),
            in_specs=[
                pl.BlockSpec((TB, 29), lambda i: (i, 0)),   # x: one batch tile / step
                pl.BlockSpec((20, 29), const),              # w1^T
                pl.BlockSpec((20, 1), const),               # b1 column
                pl.BlockSpec((11, 20), const),              # w2^T
                pl.BlockSpec((11, 1), const),               # b2 column
                pl.BlockSpec((1, 11), const),               # w3 row
                pl.BlockSpec(memory_space=pltpu.SMEM),      # b3 scalar
            ],
            out_specs=pl.BlockSpec((1, TB), lambda i: (0, i)),
        ),
        compiler_params=pltpu.CompilerParams(
            dimension_semantics=("parallel",),
            # Above the 16/32 MiB scoped defaults (v5e/v6e), below v7x's 64 MiB
            # physical; comfortably fits the double-buffered (TB, 29->128-lane)
            # x block plus activation temporaries at TB=16384.
            vmem_limit_bytes=48 << 20),
    )(x, w1_t, b1_col, w2_t, b2_col, w3_row, b3_smem)

    # Lane-dense (1, W) slab -> (B, 1), dropping padded/garbage tail lanes.
    return out_slab.reshape(-1)[:B].reshape(B, 1)


def init_params(key):
    """Deterministic init mimicking nn.Linear's U(-1/sqrt(fan_in), 1/sqrt(fan_in))."""
    dims = [(29, 20), (20, 11), (11, 1)]
    params = []
    for (fan_in, fan_out) in dims:
        key, kw, kb = jax.random.split(key, 3)
        bound = 1.0 / jnp.sqrt(fan_in)
        w = jax.random.uniform(kw, (fan_in, fan_out), jnp.float32, -bound, bound)
        b = jax.random.uniform(kb, (1, fan_out), jnp.float32, -bound, bound)
        params += [w, b]
    return params


def reference_forward(x, params):
    w1, b1, w2, b2, w3, b3 = params
    h1 = jax.nn.sigmoid(x @ w1 + b1)
    h2 = jax.nn.sigmoid(h1 @ w2 + b2)
    return jax.nn.sigmoid(h2 @ w3 + b3)


if __name__ == "__main__":
    key = jax.random.PRNGKey(0)
    k_x1, k_x2, k_p = jax.random.split(key, 3)
    params = init_params(k_p)

    # Small batch: single exact tile (TB == B == 8).
    x_small = jax.random.normal(k_x1, (8, 29), jnp.float32)
    out_small = jax.block_until_ready(mlp_forward(x_small, params))
    ref_small = reference_forward(x_small, params)
    assert out_small.shape == (8, 1)
    assert jnp.allclose(out_small, ref_small, atol=1e-4, rtol=1e-4)

    # Ragged batch, default tile: single partial tile (TB=304 > B=300), no pad copy.
    x_big = jax.random.normal(k_x2, (300, 29), jnp.float32)
    out_big = jax.block_until_ready(mlp_forward(x_big, params))
    ref_big = reference_forward(x_big, params)
    assert out_big.shape == (300, 1)
    assert jnp.allclose(out_big, ref_big, atol=1e-4, rtol=1e-4)

    # Same batch with a small tile cap: multi-tile grid, resident weights,
    # ragged tail block handled by boundary masking + wrapper slice.
    out_tiled = jax.block_until_ready(mlp_forward(x_big, params, tb=128))
    assert out_tiled.shape == (300, 1)
    assert jnp.allclose(out_tiled, ref_big, atol=1e-4, rtol=1e-4)

    print("KERNEL_OK")
</pallas_src>

<mosaic_0001>
module attributes {stable_mosaic.version = 11 : i64} {
  func.func @mlp_kernel(%arg0: i32, %arg1: memref<8x29xf32, #tpu.memory_space<vmem>>, %arg2: memref<20x29xf32, #tpu.memory_space<vmem>>, %arg3: memref<20x1xf32, #tpu.memory_space<vmem>>, %arg4: memref<11x20xf32, #tpu.memory_space<vmem>>, %arg5: memref<11x1xf32, #tpu.memory_space<vmem>>, %arg6: memref<1x11xf32, #tpu.memory_space<vmem>>, %arg7: memref<1xf32, #tpu.memory_space<smem>>, %arg8: memref<1x8xf32, #tpu.memory_space<vmem>>) attributes {dimension_semantics = [#tpu.dimension_semantics<parallel>], iteration_bounds = array<i64: 1>, scalar_prefetch = 0 : i64, scratch_operands = 0 : i64, tpu.core_type = #tpu.core_type<tc>, window_params = [{transform_indices = @transform_0, window_bounds = array<i64: 8, 29>}, {pipeline_mode = #tpu.pipeline_mode<synchronous>, transform_indices = @transform_1, window_bounds = array<i64: 20, 29>}, {pipeline_mode = #tpu.pipeline_mode<synchronous>, transform_indices = @transform_2, window_bounds = array<i64: 20, 1>}, {pipeline_mode = #tpu.pipeline_mode<synchronous>, transform_indices = @transform_3, window_bounds = array<i64: 11, 20>}, {pipeline_mode = #tpu.pipeline_mode<synchronous>, transform_indices = @transform_4, window_bounds = array<i64: 11, 1>}, {pipeline_mode = #tpu.pipeline_mode<synchronous>, transform_indices = @transform_5, window_bounds = array<i64: 1, 11>}, {transform_indices = @transform_6, window_bounds = array<i64: 1>}, {transform_indices = @transform_7, window_bounds = array<i64: 1, 8>}]} {
    %c0 = arith.constant 0 : index
    %c0_0 = arith.constant 0 : index
    %0 = vector.load %arg2[%c0, %c0_0] : memref<20x29xf32, #tpu.memory_space<vmem>>, vector<20x29xf32>
    %c0_1 = arith.constant 0 : index
    %c0_2 = arith.constant 0 : index
    %1 = vector.load %arg1[%c0_1, %c0_2] : memref<8x29xf32, #tpu.memory_space<vmem>>, vector<8x29xf32>
    %cst = arith.constant dense<0.000000e+00> : vector<20x8xf32>
    %2 = tpu.matmul %0, %1, %cst {dimension_numbers = #tpu.dot_dimension_numbers<[1], [1], [0], [0], [0, 0, 1, 0], [], []>} : vector<20x29xf32>, vector<8x29xf32>, vector<20x8xf32> -> vector<20x8xf32>
    %c0_3 = arith.constant 0 : index
    %c0_4 = arith.constant 0 : index
    %3 = vector.load %arg3[%c0_3, %c0_4] : memref<20x1xf32, #tpu.memory_space<vmem>>, vector<20x1xf32>
    %4 = vector.broadcast %3 : vector<20x1xf32> to vector<20x8xf32>
    %5 = arith.addf %2, %4 : vector<20x8xf32>
    %cst_5 = arith.constant 5.000000e-01 : f32
    %6 = vector.broadcast %cst_5 : f32 to vector<20x8xf32>
    %7 = arith.mulf %6, %5 : vector<20x8xf32>
    %8 = math.tanh %7 : vector<20x8xf32>
    %cst_6 = arith.constant 1.000000e+00 : f32
    %9 = vector.broadcast %cst_6 : f32 to vector<20x8xf32>
    %10 = arith.addf %8, %9 : vector<20x8xf32>
    %cst_7 = arith.constant 5.000000e-01 : f32
    %11 = vector.broadcast %cst_7 : f32 to vector<20x8xf32>
    %12 = arith.mulf %11, %10 : vector<20x8xf32>
    %c0_8 = arith.constant 0 : index
    %c0_9 = arith.constant 0 : index
    %13 = vector.load %arg4[%c0_8, %c0_9] : memref<11x20xf32, #tpu.memory_space<vmem>>, vector<11x20xf32>
    %cst_10 = arith.constant dense<0.000000e+00> : vector<11x8xf32>
    %14 = tpu.matmul %13, %12, %cst_10 {dimension_numbers = #tpu.dot_dimension_numbers<[1], [0], [0], [1], [0, 0, 1, 1], [], []>} : vector<11x20xf32>, vector<20x8xf32>, vector<11x8xf32> -> vector<11x8xf32>
    %c0_11 = arith.constant 0 : index
    %c0_12 = arith.constant 0 : index
    %15 = vector.load %arg5[%c0_11, %c0_12] : memref<11x1xf32, #tpu.memory_space<vmem>>, vector<11x1xf32>
    %16 = vector.broadcast %15 : vector<11x1xf32> to vector<11x8xf32>
    %17 = arith.addf %14, %16 : vector<11x8xf32>
    %cst_13 = arith.constant 5.000000e-01 : f32
    %18 = vector.broadcast %cst_13 : f32 to vector<11x8xf32>
    %19 = arith.mulf %18, %17 : vector<11x8xf32>
    %20 = math.tanh %19 : vector<11x8xf32>
    %cst_14 = arith.constant 1.000000e+00 : f32
    %21 = vector.broadcast %cst_14 : f32 to vector<11x8xf32>
    %22 = arith.addf %20, %21 : vector<11x8xf32>
    %cst_15 = arith.constant 5.000000e-01 : f32
    %23 = vector.broadcast %cst_15 : f32 to vector<11x8xf32>
    %24 = arith.mulf %23, %22 : vector<11x8xf32>
    %c0_16 = arith.constant 0 : index
    %c0_17 = arith.constant 0 : index
    %25 = vector.load %arg6[%c0_16, %c0_17] : memref<1x11xf32, #tpu.memory_space<vmem>>, vector<1x11xf32>
    %cst_18 = arith.constant dense<0.000000e+00> : vector<1x8xf32>
    %26 = tpu.matmul %25, %24, %cst_18 {dimension_numbers = #tpu.dot_dimension_numbers<[1], [0], [0], [1], [0, 0, 1, 1], [], []>} : vector<1x11xf32>, vector<11x8xf32>, vector<1x8xf32> -> vector<1x8xf32>
    %c0_19 = arith.constant 0 : index
    %27 = memref.load %arg7[%c0_19] : memref<1xf32, #tpu.memory_space<smem>>
    %28 = vector.broadcast %27 : f32 to vector<1x8xf32>
    %29 = arith.addf %26, %28 : vector<1x8xf32>
    %cst_20 = arith.constant 5.000000e-01 : f32
    %30 = vector.broadcast %cst_20 : f32 to vector<1x8xf32>
    %31 = arith.mulf %30, %29 : vector<1x8xf32>
    %32 = math.tanh %31 : vector<1x8xf32>
    %cst_21 = arith.constant 1.000000e+00 : f32
    %33 = vector.broadcast %cst_21 : f32 to vector<1x8xf32>
    %34 = arith.addf %32, %33 : vector<1x8xf32>
    %cst_22 = arith.constant 5.000000e-01 : f32
    %35 = vector.broadcast %cst_22 : f32 to vector<1x8xf32>
    %36 = arith.mulf %35, %34 : vector<1x8xf32>
    %c0_23 = arith.constant 0 : index
    %c0_24 = arith.constant 0 : index
    %37 = vector.load %arg8[%c0_23, %c0_24] : memref<1x8xf32, #tpu.memory_space<vmem>>, vector<1x8xf32>
    tpu.vector_store %arg8[%c0_23, %c0_24], %36 {strides = array<i32>} : memref<1x8xf32, #tpu.memory_space<vmem>>, vector<1x8xf32>,
    return
  }
  func.func @transform_0(%arg0: i32) -> (i32, i32) {
    %c0_i32 = arith.constant 0 : i32
    %c0_i32_0 = arith.constant 0 : i32
    return %arg0, %c0_i32 : i32, i32
  }
  func.func @transform_1(%arg0: i32) -> (i32, i32) {
    %c0_i32 = arith.constant 0 : i32
    %c0_i32_0 = arith.constant 0 : i32
    %c0_i32_1 = arith.constant 0 : i32
    return %c0_i32, %c0_i32_0 : i32, i32
  }
  func.func @transform_2(%arg0: i32) -> (i32, i32) {
    %c0_i32 = arith.constant 0 : i32
    %c0_i32_0 = arith.constant 0 : i32
    %c0_i32_1 = arith.constant 0 : i32
    return %c0_i32, %c0_i32_0 : i32, i32
  }
  func.func @transform_3(%arg0: i32) -> (i32, i32) {
    %c0_i32 = arith.constant 0 : i32
    %c0_i32_0 = arith.constant 0 : i32
    %c0_i32_1 = arith.constant 0 : i32
    return %c0_i32, %c0_i32_0 : i32, i32
  }
  func.func @transform_4(%arg0: i32) -> (i32, i32) {
    %c0_i32 = arith.constant 0 : i32
    %c0_i32_0 = arith.constant 0 : i32
    %c0_i32_1 = arith.constant 0 : i32
    return %c0_i32, %c0_i32_0 : i32, i32
  }
  func.func @transform_5(%arg0: i32) -> (i32, i32) {
    %c0_i32 = arith.constant 0 : i32
    %c0_i32_0 = arith.constant 0 : i32
    %c0_i32_1 = arith.constant 0 : i32
    return %c0_i32, %c0_i32_0 : i32, i32
  }
  func.func @transform_6(%arg0: i32) -> i32 {
    %c0_i32 = arith.constant 0 : i32
    %c0_i32_0 = arith.constant 0 : i32
    return %c0_i32 : i32
  }
  func.func @transform_7(%arg0: i32) -> (i32, i32) {
    %c0_i32 = arith.constant 0 : i32
    %c0_i32_0 = arith.constant 0 : i32
    return %c0_i32, %arg0 : i32, i32
  }
}

</mosaic_0001>

<llo_original>
// kernel: tpu_custom_call.1
$region0: #{tpu_custom_call.1}
  #allocation0 [shape = 'u32[]', space=smem, size = 0x4, offset = 0x4, fixed_abs, tag = 'smem constant byte address 0x4 - core index']
  #allocation1 [shape = 'u32[144,128]{1,0:T(1,128)}', space=vmem, size = 0x12000, scoped, tag = 'internal scratch']
  #allocation2 [shape = 'f32[1]{0:T(128)S(6)}', space=smem, size = 0x200, scoped, tag = 'scoped memory for tpu_custom_call.1']
  %s0 = inlined_call_operand.vmem [shape: f32[8,29], index: 0, kind: input, shape index: {}]
  %s1 = inlined_call_operand.vmem [shape: f32[20,29], index: 1, kind: input, shape index: {}]
  %s2 = inlined_call_operand.vmem [shape: f32[20,1], index: 2, kind: input, shape index: {}]
  %s3 = inlined_call_operand.vmem [shape: f32[11,20], index: 3, kind: input, shape index: {}]
  %s4 = inlined_call_operand.vmem [shape: f32[11,1], index: 4, kind: input, shape index: {}]
  %s5 = inlined_call_operand.vmem [shape: f32[1,11], index: 5, kind: input, shape index: {}]
  %s6 = inlined_call_operand.<no memory space> [shape: f32[1], index: 6, kind: input, shape index: {}]
  %s7 = inlined_call_operand.hbm [shape: f32[1,8], index: 7, kind: output, shape index: {}]
  %s8 = sld [smem:[#allocation0]]
  $region38: #{tpu_custom_call.1} parent=0
    _
  %s10 = ssub.s32 1, %s8
  %s11 = scalar_select 0, %s10, %s8
  %12 = sst [smem:[#allocation2]] %s6
  $region1: #{tpu_custom_call.1} parent=0
    #allocation3 [shape = 'u8[512]{0}', space=vmem, size = 0x400, scoped, tag = 'output window, operand 0, single buffered']
    #allocation4 [shape = 's32[1]{0}', space=sflag, size = 0x4, scoped, tag = 'scoped memory for tpu_custom_call.1']
    %13 = vsyncpa [#allocation4], 0
    // Predicated region
    $region2: #{tpu_custom_call.1} parent=1 // pred_check
      _
    $region3: #{tpu_custom_call.1} parent=1 // pred_check_branch
      %15 = sbr.rel (0) target = $region5
    $region4: #{tpu_custom_call.1} parent=1 // pred_region
      _
    $region5: #{tpu_custom_call.1} parent=1 // pred_fallthru
      _
    // Predicated region
    $region6: #{tpu_custom_call.1} parent=1 // pred_check
      _
    $region7: #{tpu_custom_call.1} parent=1 // pred_check_branch
      %17 = sbr.rel (0) target = $region9
    $region8: #{tpu_custom_call.1} parent=1 // pred_region
      _
    $region9: #{tpu_custom_call.1} parent=1 // pred_fallthru
      _
    // Predicated region
    $region10: #{tpu_custom_call.1} parent=1 // pred_check
      _
    $region11: #{tpu_custom_call.1} parent=1 // pred_check_branch
      %19 = sbr.rel (0) target = $region13
    $region12: #{tpu_custom_call.1} parent=1 // pred_region
      _
    $region13: #{tpu_custom_call.1} parent=1 // pred_fallthru
      _
    // Predicated region
    $region14: #{tpu_custom_call.1} parent=1 // pred_check
      _
    $region15: #{tpu_custom_call.1} parent=1 // pred_check_branch
      %21 = sbr.rel (0) target = $region17
    $region16: #{tpu_custom_call.1} parent=1 // pred_region
      _
    $region17: #{tpu_custom_call.1} parent=1 // pred_fallthru
      _
    // Predicated region
    $region18: #{tpu_custom_call.1} parent=1 // pred_check
      _
    $region19: #{tpu_custom_call.1} parent=1 // pred_check_branch
      %23 = sbr.rel (0) target = $region21
    $region20: #{tpu_custom_call.1} parent=1 // pred_region
      _
    $region21: #{tpu_custom_call.1} parent=1 // pred_fallthru
      _
    // Predicated region
    $region22: #{tpu_custom_call.1} parent=1 // pred_check
      _
    $region23: #{tpu_custom_call.1} parent=1 // pred_check_branch
      %25 = sbr.rel (0) target = $region25
    $region24: #{tpu_custom_call.1} parent=1 // pred_region
      _
    $region25: #{tpu_custom_call.1} parent=1 // pred_fallthru
      _
    // Predicated region
    $region26: #{tpu_custom_call.1} parent=1 // pred_check
      _
    $region27: #{tpu_custom_call.1} parent=1 // pred_check_branch
      %27 = sbr.rel (0) target = $region29
    $region28: #{tpu_custom_call.1} parent=1 // pred_region
      _
    $region29: #{tpu_custom_call.1} parent=1 // pred_fallthru
      _
    %v28 = vld [vmem:[%s1] sm:$0xff]
    %v29 = vld [vmem:[%s1 + $0x8] sm:$0xff]
    %v30 = vld [vmem:[%s1 + $0x10] sm:$0xf]
    %v31 = vld [vmem:[%s0] sm:$0xff]
    %v32 = vld [vmem:[%s2] sm:$0xff]
    %v33 = vld [vmem:[%s2 + $0x8] sm:$0xff]
    %v34 = vld [vmem:[%s2 + $0x10] sm:$0xf]
    %36 = vset.pattern.permute.xlu0 0
    %37 = vperm.xlu0 %36, %v32
    %v38 = vpop.permute.xlu0 %37
    %41 = vset.pattern.permute.xlu0 0
    %42 = vperm.xlu0 %41, %v33
    %v43 = vpop.permute.xlu0 %42
    %46 = vset.pattern.permute.xlu0 0
    %47 = vperm.xlu0 %46, %v34
    %v48 = vpop.permute.xlu0 %47
    %vm50 = vcmask 236544
    %v52 = vsel %vm50, %v28, 0
    %v55 = vsel %vm50, %v29, 0
    %v58 = vsel %vm50, %v30, 0
    %v61 = vsel %vm50, %v31, 0
    %63 = vmatprep.subr.mxu0 0.0
    %64 = vmatpush1.xpose.msra.mxu0 %v61
    %65 = vmatprep.subr.mxu0 0.0
    %66 = vmatpush1.xpose.msra.mxu0 0.0
    %67 = vmatprep.subr.mxu0 0.0
    %68 = vmatpush1.xpose.msra.mxu0 0.0
    %69 = vmatprep.subr.mxu0 0.0
    %70 = vmatpush1.xpose.msra.mxu0 0.0
    %71 = vmatprep.subr.mxu0 0.0
    %72 = vmatpush1.xpose.msra.mxu0 0.0
    %73 = vmatprep.subr.mxu0 0.0
    %74 = vmatpush1.xpose.msra.mxu0 0.0
    %75 = vmatprep.subr.mxu0 0.0
    %76 = vmatpush1.xpose.msra.mxu0 0.0
    %77 = vmatprep.subr.mxu0 0.0
    %78 = vmatpush1.xpose.msra.mxu0 0.0
    %79 = vmatprep.subr.mxu0 0.0
    %80 = vmatpush1.xpose.msra.mxu0 0.0
    %81 = vmatprep.subr.mxu0 0.0
    %82 = vmatpush1.xpose.msra.mxu0 0.0
    %83 = vmatprep.subr.mxu0 0.0
    %84 = vmatpush1.xpose.msra.mxu0 0.0
    %85 = vmatprep.subr.mxu0 0.0
    %86 = vmatpush1.xpose.msra.mxu0 0.0
    %87 = vmatprep.subr.mxu0 0.0
    %88 = vmatpush1.xpose.msra.mxu0 0.0
    %89 = vmatprep.subr.mxu0 0.0
    %90 = vmatpush1.xpose.msra.mxu0 0.0
    %91 = vmatprep.subr.mxu0 0.0
    %92 = vmatpush1.xpose.msra.mxu0 0.0
    %93 = vmatprep.subr.mxu0 0.0
    %94 = vmatpush1.xpose.msra.mxu0 0.0
    %95 = vmatprep.subr.mxu0 0.0
    %96 = vmatpush1.xpose.msra.mxu0 0.0
    %97 = vmatprep.subr.mxu0 0.0
    %98 = vmatpush1.xpose.msra.mxu0 0.0
    %99 = vmatprep.subr.mxu0 0.0
    %100 = vmatpush1.xpose.msra.mxu0 0.0
    %101 = vmatprep.subr.mxu0 0.0
    %102 = vmatpush1.xpose.msra.mxu0 0.0
    %103 = vmatprep.subr.mxu0 0.0
    %104 = vmatpush1.xpose.msra.mxu0 0.0
    %105 = vmatprep.subr.mxu0 0.0
    %106 = vmatpush1.xpose.msra.mxu0 0.0
    %107 = vmatprep.subr.mxu0 0.0
    %108 = vmatpush1.xpose.msra.mxu0 0.0
    %109 = vmatprep.subr.mxu0 0.0
    %110 = vmatpush1.xpose.msra.mxu0 0.0
    %111 = vmatprep.subr.mxu0 0.0
    %112 = vmatpush1.xpose.msra.mxu0 0.0
    %113 = vmatprep.subr.mxu0 0.0
    %114 = vmatpush1.xpose.msra.mxu0 0.0
    %115 = vmatprep.subr.mxu0 0.0
    %116 = vmatpush1.xpose.msra.mxu0 0.0
    %117 = vmatprep.subr.mxu0 0.0
    %118 = vmatpush1.xpose.msra.mxu0 0.0
    %119 = vmatprep.subr.mxu0 0.0
    %120 = vmatpush1.xpose.msra.mxu0 0.0
    %121 = vmatprep.subr.mxu0 0.0
    %122 = vmatpush1.xpose.msra.mxu0 0.0
    %123 = vmatprep.subr.mxu0 0.0
    %124 = vmatpush1.xpose.msra.mxu0 0.0
    %125 = vmatprep.subr.mxu0 0.0
    %126 = vmatpush1.xpose.msra.mxu0 0.0
    %127 = vmatprep.mubr.f32.mxu0 0.0
    %128 = vmatmul.mubr.f32.gmra.mrb[0].mxu0 %v52
    %v129 = vpop.f32.mrb[0].mxu0
    %v130 = vadd.f32 %v38, %v129
    %v131 = vpop.f32.mrb[0].mxu0
    %132 = vmatprep.mubr.f32.mxu0 0.0
    %133 = vmatmul.mubr.f32.gmra.mrb[0].mxu0 %v55
    %v134 = vpop.f32.mrb[0].mxu0
    %v135 = vadd.f32 %v43, %v134
    %v136 = vpop.f32.mrb[0].mxu0
    %137 = vmatprep.mubr.f32.mxu0 0.0
    %138 = vmatmul.mubr.f32.gmra.mrb[0].mxu0 %v58
    %v139 = vpop.f32.mrb[0].mxu0
    %v140 = vadd.f32 %v48, %v139
    %v141 = vpop.f32.mrb[0].mxu0
    %142 = vdwg.mxu0
    %v143 = vmul.f32 %v130, 0.5
    %v144 = vmul.f32 %v135, 0.5
    %v145 = vmul.f32 %v140, 0.5
    %v146 = vtanh.pop %v143
    %v147 = vtanh.pop %v144
    %v148 = vtanh.pop %v145
    %v149 = vadd.f32 %v146, 1.0
    %v150 = vadd.f32 %v147, 1.0
    %v151 = vadd.f32 %v148, 1.0
    %v152 = vmul.f32 %v149, 0.5
    %v153 = vmul.f32 %v150, 0.5
    %v154 = vmul.f32 %v151, 0.5
    %v155 = vld [vmem:[%s3] sm:$0xff]
    %v156 = vld [vmem:[%s3 + $0x8] sm:$0x7]
    %v157 = vld [vmem:[%s4] sm:$0xff]
    %v158 = vld [vmem:[%s4 + $0x8] sm:$0x7]
    %160 = vset.pattern.permute.xlu0 0
    %161 = vperm.xlu0 %160, %v157
    %v162 = vpop.permute.xlu0 %161
    %165 = vset.pattern.permute.xlu0 0
    %166 = vperm.xlu0 %165, %v158
    %v167 = vpop.permute.xlu0 %166
    %vm169 = vcmask 162816
    %v171 = vsel %vm169, %v155, 0
    %v174 = vsel %vm169, %v156, 0
    %vm176 = vcmask 1043456
    %v178 = vsel %vm176, %v154, 0
    %180 = vmatprep.subr.mxu0 0.0
    %181 = vmatpush1.msra.mxu0 %v152
    %182 = vmatprep.subr.mxu0 0.0
    %183 = vmatpush1.msra.mxu0 %v153
    %184 = vmatprep.subr.mxu0 0.0
    %185 = vmatpush1.msra.mxu0 %v178
    %186 = vmatprep.subr.mxu0 0.0
    %187 = vmatpush1.msra.mxu0 0.0
    %188 = vmatprep.subr.mxu0 0.0
    %189 = vmatpush1.msra.mxu0 0.0
    %190 = vmatprep.subr.mxu0 0.0
    %191 = vmatpush1.msra.mxu0 0.0
    %192 = vmatprep.subr.mxu0 0.0
    %193 = vmatpush1.msra.mxu0 0.0
    %194 = vmatprep.subr.mxu0 0.0
    %195 = vmatpush1.msra.mxu0 0.0
    %196 = vmatprep.subr.mxu0 0.0
    %197 = vmatpush1.msra.mxu0 0.0
    %198 = vmatprep.subr.mxu0 0.0
    %199 = vmatpush1.msra.mxu0 0.0
    %200 = vmatprep.subr.mxu0 0.0
    %201 = vmatpush1.msra.mxu0 0.0
    %202 = vmatprep.subr.mxu0 0.0
    %203 = vmatpush1.msra.mxu0 0.0
    %204 = vmatprep.subr.mxu0 0.0
    %205 = vmatpush1.msra.mxu0 0.0
    %206 = vmatprep.subr.mxu0 0.0
    %207 = vmatpush1.msra.mxu0 0.0
    %208 = vmatprep.subr.mxu0 0.0
    %209 = vmatpush1.msra.mxu0 0.0
    %210 = vmatprep.subr.mxu0 0.0
    %211 = vmatpush1.msra.mxu0 0.0
    %212 = vmatprep.subr.mxu0 0.0
    %213 = vmatpush1.msra.mxu0 0.0
    %214 = vmatprep.subr.mxu0 0.0
    %215 = vmatpush1.msra.mxu0 0.0
    %216 = vmatprep.subr.mxu0 0.0
    %217 = vmatpush1.msra.mxu0 0.0
    %218 = vmatprep.subr.mxu0 0.0
    %219 = vmatpush1.msra.mxu0 0.0
    %220 = vmatprep.subr.mxu0 0.0
    %221 = vmatpush1.msra.mxu0 0.0
    %222 = vmatprep.subr.mxu0 0.0
    %223 = vmatpush1.msra.mxu0 0.0
    %224 = vmatprep.subr.mxu0 0.0
    %225 = vmatpush1.msra.mxu0 0.0
    %226 = vmatprep.subr.mxu0 0.0
    %227 = vmatpush1.msra.mxu0 0.0
    %228 = vmatprep.subr.mxu0 0.0
    %229 = vmatpush1.msra.mxu0 0.0
    %230 = vmatprep.subr.mxu0 0.0
    %231 = vmatpush1.msra.mxu0 0.0
    %232 = vmatprep.subr.mxu0 0.0
    %233 = vmatpush1.msra.mxu0 0.0
    %234 = vmatprep.subr.mxu0 0.0
    %235 = vmatpush1.msra.mxu0 0.0
    %236 = vmatprep.subr.mxu0 0.0
    %237 = vmatpush1.msra.mxu0 0.0
    %238 = vmatprep.subr.mxu0 0.0
    %239 = vmatpush1.msra.mxu0 0.0
    %240 = vmatprep.subr.mxu0 0.0
    %241 = vmatpush1.msra.mxu0 0.0
    %242 = vmatprep.subr.mxu0 0.0
    %243 = vmatpush1.msra.mxu0 0.0
    %244 = vmatprep.mubr.f32.mxu0 0.0
    %245 = vmatmul.mubr.f32.gmra.mrb[0].mxu0 %v171
    %v246 = vpop.f32.mrb[0].mxu0
    %v247 = vadd.f32 %v162, %v246
    %v248 = vpop.f32.mrb[0].mxu0
    %249 = vmatprep.mubr.f32.mxu0 0.0
    %250 = vmatmul.mubr.f32.gmra.mrb[0].mxu0 %v174
    %v251 = vpop.f32.mrb[0].mxu0
    %v252 = vadd.f32 %v167, %v251
    %v253 = vpop.f32.mrb[0].mxu0
    %254 = vdwg.mxu0
    %v255 = vmul.f32 %v247, 0.5
    %v256 = vmul.f32 %v252, 0.5
    %v257 = vtanh.pop %v255
    %v258 = vtanh.pop %v256
    %v259 = vadd.f32 %v257, 1.0
    %v260 = vadd.f32 %v258, 1.0
    %v261 = vmul.f32 %v259, 0.5
    %v262 = vmul.f32 %v260, 0.5
    %v263 = vld [vmem:[%s5] sm:$0x1]
    %s264 = sld [smem:[#allocation2]]
    %v265 = vstv %s264
    %vm266 = vcmask 89088
    %v268 = vsel %vm266, %v263, 0
    %vm270 = vcmask 1042432
    %v272 = vsel %vm270, %v262, 0
    %274 = vmatprep.subr.mxu0 0.0
    %275 = vmatpush1.msra.mxu0 %v261
    %276 = vmatprep.subr.mxu0 0.0
    %277 = vmatpush1.msra.mxu0 %v272
    %278 = vmatprep.subr.mxu0 0.0
    %279 = vmatpush1.msra.mxu0 0.0
    %280 = vmatprep.subr.mxu0 0.0
    %281 = vmatpush1.msra.mxu0 0.0
    %282 = vmatprep.subr.mxu0 0.0
    %283 = vmatpush1.msra.mxu0 0.0
    %284 = vmatprep.subr.mxu0 0.0
    %285 = vmatpush1.msra.mxu0 0.0
    %286 = vmatprep.subr.mxu0 0.0
    %287 = vmatpush1.msra.mxu0 0.0
    %288 = vmatprep.subr.mxu0 0.0
    %289 = vmatpush1.msra.mxu0 0.0
    %290 = vmatprep.subr.mxu0 0.0
    %291 = vmatpush1.msra.mxu0 0.0
    %292 = vmatprep.subr.mxu0 0.0
    %293 = vmatpush1.msra.mxu0 0.0
    %294 = vmatprep.subr.mxu0 0.0
    %295 = vmatpush1.msra.mxu0 0.0
    %296 = vmatprep.subr.mxu0 0.0
    %297 = vmatpush1.msra.mxu0 0.0
    %298 = vmatprep.subr.mxu0 0.0
    %299 = vmatpush1.msra.mxu0 0.0
    %300 = vmatprep.subr.mxu0 0.0
    %301 = vmatpush1.msra.mxu0 0.0
    %302 = vmatprep.subr.mxu0 0.0
    %303 = vmatpush1.msra.mxu0 0.0
    %304 = vmatprep.subr.mxu0 0.0
    %305 = vmatpush1.msra.mxu0 0.0
    %306 = vmatprep.subr.mxu0 0.0
    %307 = vmatpush1.msra.mxu0 0.0
    %308 = vmatprep.subr.mxu0 0.0
    %309 = vmatpush1.msra.mxu0 0.0
    %310 = vmatprep.subr.mxu0 0.0
    %311 = vmatpush1.msra.mxu0 0.0
    %312 = vmatprep.subr.mxu0 0.0
    %313 = vmatpush1.msra.mxu0 0.0
    %314 = vmatprep.subr.mxu0 0.0
    %315 = vmatpush1.msra.mxu0 0.0
    %316 = vmatprep.subr.mxu0 0.0
    %317 = vmatpush1.msra.mxu0 0.0
    %318 = vmatprep.subr.mxu0 0.0
    %319 = vmatpush1.msra.mxu0 0.0
    %320 = vmatprep.subr.mxu0 0.0
    %321 = vmatpush1.msra.mxu0 0.0
    %322 = vmatprep.subr.mxu0 0.0
    %323 = vmatpush1.msra.mxu0 0.0
    %324 = vmatprep.subr.mxu0 0.0
    %325 = vmatpush1.msra.mxu0 0.0
    %326 = vmatprep.subr.mxu0 0.0
    %327 = vmatpush1.msra.mxu0 0.0
    %328 = vmatprep.subr.mxu0 0.0
    %329 = vmatpush1.msra.mxu0 0.0
    %330 = vmatprep.subr.mxu0 0.0
    %331 = vmatpush1.msra.mxu0 0.0
    %332 = vmatprep.subr.mxu0 0.0
    %333 = vmatpush1.msra.mxu0 0.0
    %334 = vmatprep.subr.mxu0 0.0
    %335 = vmatpush1.msra.mxu0 0.0
    %336 = vmatprep.subr.mxu0 0.0
    %337 = vmatpush1.msra.mxu0 0.0
    %338 = vmatprep.mubr.f32.mxu0 0.0
    %339 = vmatmul.mubr.f32.gmra.mrb[0].mxu0 %v268
    %v340 = vpop.f32.mrb[0].mxu0
    %v341 = vadd.f32 %v265, %v340
    %v342 = vpop.f32.mrb[0].mxu0
    %343 = vdwg.mxu0
    %v344 = vmul.f32 %v341, 0.5
    %v345 = vtanh.pop %v344
    %v346 = vadd.f32 %v345, 1.0
    %v347 = vmul.f32 %v346, 0.5
    %vm348 = vcmask 57344
    %349 = vst.msk [vmem:[#allocation3] sm:$0x1] %vm348, %v347
    // Predicated region
    $region30: #{tpu_custom_call.1} parent=1 // pred_check
      _
    $region31: #{tpu_custom_call.1} parent=1 // pred_check_branch
      %351 = sbr.rel (0) target = $region33
    $region32: #{tpu_custom_call.1} parent=1 // pred_region
      %s353 = ssub.s32 16, 16
      %354 = vsyncadd [#allocation4], %s353
      %s356 = sshll.u32 [#allocation3], 4
      %s357 = int_to_ptr.vmem [resolvable:$true] %s356
      %359 = dma.vmem_to_hbm [thread:$0]  %s357, 16, %s7, [#allocation4]
    $region33: #{tpu_custom_call.1} parent=1 // pred_fallthru
      _
    // Predicated region
    $region34: #{tpu_custom_call.1} parent=1 // pred_check
      _
    $region35: #{tpu_custom_call.1} parent=1 // pred_check_branch
      %361 = sbr.rel (0) target = $region37
    $region36: #{tpu_custom_call.1} parent=1 // pred_region
      %362 = dma.done [#allocation4], 16
    $region37: #{tpu_custom_call.1} parent=1 // pred_fallthru
      _
    %363 = vsyncpa [#allocation4], 1

</llo_original>
